<compile_context>
chip_gen: v7x
topology: tpu7x:2x2x1
jax: 0.10.0
libtpu: 0.0.40
codegen_flags: <defaults>
</compile_context>

<pallas_src>
import functools

import jax
import jax.numpy as jnp
from jax.experimental import pallas as pl
from jax.experimental.pallas import tpu as pltpu

COSINE_EPS = 1e-8  # F.cosine_similarity default eps


def _cosine_loss_kernel(*refs, eps, n_rows, tile_rows, n_steps, has_mask):
    if has_mask:
        x_ref, y_ref, m_ref, out_ref, acc_ref = refs
    else:
        x_ref, y_ref, out_ref, acc_ref = refs

    k = pl.program_id(1)  # reduction axis (row tiles handled by this partial)

    @pl.when(k == 0)
    def _init():
        acc_ref[...] = jnp.zeros_like(acc_ref)

    x = x_ref[...]                                   # (TM, D), native dtype
    y = y_ref[...]                                   # (TM, D), native dtype

    # Products in native dtype (bf16 VALU on v6e/v7x); reduce/accumulate in f32.
    dot = jnp.sum((x * y).astype(jnp.float32), axis=-1, keepdims=True)   # (TM,1)
    nx2 = jnp.sum((x * x).astype(jnp.float32), axis=-1, keepdims=True)   # (TM,1)
    ny2 = jnp.sum((y * y).astype(jnp.float32), axis=-1, keepdims=True)   # (TM,1)

    # sqrt(max(n^2, eps^2)) == max(sqrt(n^2), eps), so a single EUP rsqrt
    # replaces two sqrts + one vector divide.
    eps2 = jnp.float32(eps) * jnp.float32(eps)
    inv_denom = jax.lax.rsqrt(jnp.maximum(nx2, eps2) * jnp.maximum(ny2, eps2))
    neg_cos = -(dot * inv_denom)                                          # (TM,1)

    if has_mask:
        neg_cos = neg_cos * m_ref[...].astype(jnp.float32)

    # In-kernel ragged-tail masking (no host-side padding).  Rows whose global
    # index >= n_rows contribute exactly 0; jnp.where (not a multiply) so
    # garbage data in the out-of-range part of the last tile can never
    # propagate NaN/Inf.  `blk` is the UNCLAMPED logical block id, so clamped
    # overshoot blocks (parallel-axis remainder) are also fully masked out.
    blk = pl.program_id(0) * n_steps + k
    row_ids = blk * tile_rows + jax.lax.broadcasted_iota(
        jnp.int32, (tile_rows, 1), 0)
    valid = row_ids < n_rows
    acc_ref[...] += jnp.where(valid, neg_cos, 0.0)

    @pl.when(k == pl.num_programs(1) - 1)
    def _finalize():
        total = jnp.sum(acc_ref[...], axis=(0, 1), keepdims=True)   # (1, 1)
        out_ref[...] = total.reshape(1, 1, 1)


def _chip_config():
    """Best-effort (vmem_capacity_bytes, tensorcores_per_device) detection."""
    vmem_cap = None
    try:
        info = pltpu.get_tpu_info()
        vmem_cap = getattr(info, "vmem_capacity_bytes", None)
        vmem_cap = int(vmem_cap) if vmem_cap else None
    except Exception:
        vmem_cap = None

    kind = ""
    try:
        kind = jax.devices()[0].device_kind.lower()
    except Exception:
        pass

    cores = 2 if any(t in kind for t in ("v7", "7x", "v4", "v5p")) else 1

    if vmem_cap is None or vmem_cap <= 0:
        # Conservative fallback: assume small (64 MiB) VMEM unless the device
        # kind clearly identifies a 128 MiB generation.
        if any(t in kind for t in ("v2", "v3", "v4", "v5", "v6")):
            vmem_cap = 128 << 20
        else:
            vmem_cap = 64 << 20
    return int(vmem_cap), cores


def cosine_loss_with_mask(x, y, mask=None, *, reduction="mean",
                          tile_rows=None, num_partials=None):
    """x, y: (B, S, D); mask: (B, S) or None. Returns scalar f32."""
    b, s, d = x.shape
    assert y.shape == (b, s, d)
    n = b * s

    xf = x.reshape(n, d)                    # free view, no HBM copy
    yf = y.reshape(n, d)
    has_mask = mask is not None
    if has_mask:
        assert mask.shape == (b, s)
        mf = mask.reshape(n, 1).astype(jnp.float32)

    elt = jnp.dtype(x.dtype).itemsize
    row_mult = {1: 32, 2: 16}.get(elt, 8)   # sublane granularity per dtype

    def _round_up(v, m):
        return ((v + m - 1) // m) * m

    vmem_cap, cores = _chip_config()
    p = cores if num_partials is None else max(1, int(num_partials))

    # Generation-specific VMEM budget.
    if vmem_cap >= (100 << 20):             # v5e / v6e / v5p: 128 MiB VMEM
        max_tile_bytes = 8 << 20
        vmem_budget = 96 << 20
    else:                                   # v7x-class: 64 MiB per TensorCore
        max_tile_bytes = 4 << 20
        vmem_budget = 48 << 20

    in_row_bytes = max(1, d * elt)
    f32_row_bytes = d * 4
    # 2 input streams x 2 pipeline buffers + ~3 f32 product/reduce
    # intermediates + double-buffered f32 mask + f32 accumulator.
    per_row_vmem = (4 * in_row_bytes + 3 * f32_row_bytes
                    + (2 * 4 if has_mask else 0) + 4)

    rows_cap_budget = max(row_mult, (vmem_budget - (4 << 20)) // per_row_vmem)
    rows_cap_tile = max(row_mult, max_tile_bytes // in_row_bytes)
    rows_per_partial = _round_up(pl.cdiv(n, p), row_mult)

    if tile_rows is None:
        tile_rows = min(rows_cap_budget, rows_cap_tile)
    tile_rows = min(int(tile_rows), rows_cap_budget, rows_cap_tile,
                    rows_per_partial)
    tile_rows = max(row_mult, (tile_rows // row_mult) * row_mult)

    n_blocks = pl.cdiv(n, tile_rows)
    p = max(1, min(p, n_blocks))
    n_steps = pl.cdiv(n_blocks, p)
    last_block = n_blocks - 1

    def in_map(pi, k):
        # Clamp so overshoot steps (parallel-axis remainder) stay in bounds;
        # their contribution is zeroed in-kernel via the row-index mask.
        return (jnp.minimum(pi * n_steps + k, last_block), 0)

    in_specs = [
        pl.BlockSpec((tile_rows, d), in_map),
        pl.BlockSpec((tile_rows, d), in_map),
    ]
    args = [xf, yf]
    if has_mask:
        in_specs.append(pl.BlockSpec((tile_rows, 1), in_map))
        args.append(mf)

    # VMEM accounting (inputs double-buffered + f32 intermediates + headroom).
    vmem_needed = (2 * 2 * tile_rows * in_row_bytes
                   + 3 * tile_rows * f32_row_bytes
                   + (2 * tile_rows * 4 if has_mask else 0)
                   + tile_rows * 4
                   + (2 << 20))
    vmem_limit = int(min(max(vmem_needed, 32 << 20), vmem_budget))

    kernel = functools.partial(
        _cosine_loss_kernel, eps=COSINE_EPS, n_rows=n,
        tile_rows=tile_rows, n_steps=n_steps, has_mask=has_mask)

    partials = pl.pallas_call(
        kernel,
        out_shape=jax.ShapeDtypeStruct((p, 1, 1), jnp.float32),
        grid_spec=pltpu.PrefetchScalarGridSpec(
            num_scalar_prefetch=0,
            grid=(p, n_steps),
            in_specs=in_specs,
            out_specs=pl.BlockSpec((1, 1, 1), lambda pi, k: (pi, 0, 0)),
            scratch_shapes=[pltpu.VMEM((tile_rows, 1), jnp.float32)],
        ),
        compiler_params=pltpu.CompilerParams(
            dimension_semantics=("parallel", "arbitrary"),
            vmem_limit_bytes=vmem_limit,
        ),
    )(*args)

    total = jnp.sum(partials)
    if reduction == "mean":
        return total / jnp.float32(n)     # divide by ORIGINAL N
    if reduction == "sum":
        return total
    # TODO(synk): reduction='none' (per-element (B, S) loss output) is not kerneled here.
    raise NotImplementedError("reduction must be 'mean' or 'sum'")


def _reference(x, y, mask=None, reduction="mean", eps=COSINE_EPS):
    xf = x.astype(jnp.float32)
    yf = y.astype(jnp.float32)
    dot = jnp.sum(xf * yf, axis=2)
    nx = jnp.sqrt(jnp.sum(xf * xf, axis=2))
    ny = jnp.sqrt(jnp.sum(yf * yf, axis=2))
    cos = dot / (jnp.maximum(nx, eps) * jnp.maximum(ny, eps))
    loss = -cos
    if mask is not None:
        loss = loss * mask
    return jnp.sum(loss) if reduction == "sum" else jnp.mean(loss)


if __name__ == "__main__":
    key = jax.random.PRNGKey(0)
    k1, k2, k3 = jax.random.split(key, 3)

    # (B, S, D) with cosine similarity along dim=2, mask over (B, S)
    B, S, D = 2, 8, 32
    x = jax.random.normal(k1, (B, S, D), dtype=jnp.float32)
    y = jax.random.normal(k2, (B, S, D), dtype=jnp.float32)
    mask = (jax.random.uniform(k3, (B, S)) > 0.5).astype(jnp.float32)

    loss = jax.block_until_ready(cosine_loss_with_mask(x, y, mask))
    ref = _reference(x, y, mask)
    assert jnp.allclose(loss, ref, rtol=2e-5, atol=2e-5), (loss, ref)

    # mask=None path (2-input kernel variant)
    loss_nm = jax.block_until_ready(cosine_loss_with_mask(x, y, None))
    ref_nm = _reference(x, y, None)
    assert jnp.allclose(loss_nm, ref_nm, rtol=2e-5, atol=2e-5), (loss_nm, ref_nm)

    # Ragged-tail path: N not a multiple of tile_rows*p, handled in-kernel
    # (no host-side padding), 'sum' reduction.
    B2, S2 = 2, 20
    x2 = jax.random.normal(k1, (B2, S2, D), dtype=jnp.float32)
    y2 = jax.random.normal(k2, (B2, S2, D), dtype=jnp.float32)
    m2 = (jax.random.uniform(k3, (B2, S2)) > 0.5).astype(jnp.float32)
    loss2 = jax.block_until_ready(
        cosine_loss_with_mask(x2, y2, m2, reduction="sum", tile_rows=16))
    ref2 = _reference(x2, y2, m2, reduction="sum")
    assert jnp.allclose(loss2, ref2, rtol=2e-5, atol=2e-5), (loss2, ref2)

    print("KERNEL_OK")
</pallas_src>

<mosaic_0001>
module attributes {stable_mosaic.version = 11 : i64} {
  func.func @_cosine_loss_kernel(%arg0: i32, %arg1: i32, %arg2: memref<16x32xf32, #tpu.memory_space<vmem>>, %arg3: memref<16x32xf32, #tpu.memory_space<vmem>>, %arg4: memref<16x1xf32, #tpu.memory_space<vmem>>, %arg5: memref<1x1x1xf32, #tpu.memory_space<vmem>>, %arg6: memref<16x1xf32, #tpu.memory_space<vmem>>) attributes {dimension_semantics = [#tpu.dimension_semantics<parallel>, #tpu.dimension_semantics<arbitrary>], iteration_bounds = array<i64: 1, 1>, scalar_prefetch = 0 : i64, scratch_operands = 1 : i64, tpu.core_type = #tpu.core_type<tc>, window_params = [{transform_indices = @transform_0, window_bounds = array<i64: 16, 32>}, {transform_indices = @transform_1, window_bounds = array<i64: 16, 32>}, {transform_indices = @transform_2, window_bounds = array<i64: 16, 1>}, {transform_indices = @transform_3, window_bounds = array<i64: 1, 1, 1>}]} {
    %c0_i32 = arith.constant 0 : i32
    %0 = arith.cmpi eq, %arg1, %c0_i32 : i32
    %1 = arith.extui %0 : i1 to i32
    %c0_i32_0 = arith.constant 0 : i32
    %2 = arith.cmpi ne, %1, %c0_i32_0 : i32
    scf.if %2 {
      %cst_19 = arith.constant 0.000000e+00 : f32
      %42 = vector.broadcast %cst_19 : f32 to vector<16x1xf32>
      %c0_20 = arith.constant 0 : index
      %c0_21 = arith.constant 0 : index
      %43 = vector.load %arg6[%c0_20, %c0_21] : memref<16x1xf32, #tpu.memory_space<vmem>>, vector<16x1xf32>
      tpu.vector_store %arg6[%c0_20, %c0_21], %42 {strides = array<i32>} : memref<16x1xf32, #tpu.memory_space<vmem>>, vector<16x1xf32>,
    } else {
    }
    %c0 = arith.constant 0 : index
    %c0_1 = arith.constant 0 : index
    %3 = vector.load %arg2[%c0, %c0_1] : memref<16x32xf32, #tpu.memory_space<vmem>>, vector<16x32xf32>
    %c0_2 = arith.constant 0 : index
    %c0_3 = arith.constant 0 : index
    %4 = vector.load %arg3[%c0_2, %c0_3] : memref<16x32xf32, #tpu.memory_space<vmem>>, vector<16x32xf32>
    %5 = arith.mulf %3, %4 : vector<16x32xf32>
    %cst = arith.constant dense<0.000000e+00> : vector<16xf32>
    %6 = vector.multi_reduction <add>, %5, %cst [1] : vector<16x32xf32> to vector<16xf32>
    %7 = vector.shape_cast %6 : vector<16xf32> to vector<16x1xf32>
    %8 = arith.mulf %3, %3 : vector<16x32xf32>
    %cst_4 = arith.constant dense<0.000000e+00> : vector<16xf32>
    %9 = vector.multi_reduction <add>, %8, %cst_4 [1] : vector<16x32xf32> to vector<16xf32>
    %10 = vector.shape_cast %9 : vector<16xf32> to vector<16x1xf32>
    %11 = arith.mulf %4, %4 : vector<16x32xf32>
    %cst_5 = arith.constant dense<0.000000e+00> : vector<16xf32>
    %12 = vector.multi_reduction <add>, %11, %cst_5 [1] : vector<16x32xf32> to vector<16xf32>
    %13 = vector.shape_cast %12 : vector<16xf32> to vector<16x1xf32>
    %cst_6 = arith.constant 9.99999993E-9 : f32
    %cst_7 = arith.constant 9.99999993E-9 : f32
    %14 = arith.mulf %cst_6, %cst_7 : f32
    %15 = vector.broadcast %14 : f32 to vector<16x1xf32>
    %16 = arith.maximumf %10, %15 : vector<16x1xf32>
    %17 = vector.broadcast %14 : f32 to vector<16x1xf32>
    %18 = arith.maximumf %13, %17 : vector<16x1xf32>
    %19 = arith.mulf %16, %18 : vector<16x1xf32>
    %20 = math.rsqrt %19 : vector<16x1xf32>
    %21 = arith.mulf %7, %20 : vector<16x1xf32>
    %cst_8 = arith.constant 0.000000e+00 : f32
    %22 = vector.broadcast %cst_8 : f32 to vector<16x1xf32>
    %23 = arith.subf %22, %21 : vector<16x1xf32>
    %c0_9 = arith.constant 0 : index
    %c0_10 = arith.constant 0 : index
    %24 = vector.load %arg4[%c0_9, %c0_10] : memref<16x1xf32, #tpu.memory_space<vmem>>, vector<16x1xf32>
    %25 = arith.mulf %23, %24 : vector<16x1xf32>
    %c1_i32 = arith.constant 1 : i32
    %26 = arith.muli %arg0, %c1_i32 : i32
    %27 = arith.addi %26, %arg1 : i32
    %c16_i32 = arith.constant 16 : i32
    %28 = arith.muli %27, %c16_i32 : i32
    %29 = tpu.iota {dimensions = array<i32: 0>} : vector<16x1xi32>
    %30 = vector.broadcast %28 : i32 to vector<16x1xi32>
    %31 = arith.addi %30, %29 : vector<16x1xi32>
    %c16_i32_11 = arith.constant 16 : i32
    %32 = vector.broadcast %c16_i32_11 : i32 to vector<16x1xi32>
    %33 = arith.cmpi slt, %31, %32 : vector<16x1xi32>
    %c0_12 = arith.constant 0 : index
    %c0_13 = arith.constant 0 : index
    %34 = vector.load %arg6[%c0_12, %c0_13] : memref<16x1xf32, #tpu.memory_space<vmem>>, vector<16x1xf32>
    %cst_14 = arith.constant 0.000000e+00 : f32
    %35 = vector.broadcast %cst_14 : f32 to vector<16x1xf32>
    %36 = arith.select %33, %25, %35 : vector<16x1xi1>, vector<16x1xf32>
    %37 = arith.addf %34, %36 : vector<16x1xf32>
    %c0_15 = arith.constant 0 : index
    %c0_16 = arith.constant 0 : index
    %38 = vector.load %arg6[%c0_15, %c0_16] : memref<16x1xf32, #tpu.memory_space<vmem>>, vector<16x1xf32>
    tpu.vector_store %arg6[%c0_15, %c0_16], %37 {strides = array<i32>} : memref<16x1xf32, #tpu.memory_space<vmem>>, vector<16x1xf32>,
    %c0_i32_17 = arith.constant 0 : i32
    %39 = arith.cmpi eq, %arg1, %c0_i32_17 : i32
    %40 = arith.extui %39 : i1 to i32
    %c0_i32_18 = arith.constant 0 : i32
    %41 = arith.cmpi ne, %40, %c0_i32_18 : i32
    scf.if %41 {
      %c0_19 = arith.constant 0 : index
      %c0_20 = arith.constant 0 : index
      %42 = vector.load %arg6[%c0_19, %c0_20] : memref<16x1xf32, #tpu.memory_space<vmem>>, vector<16x1xf32>
      %43 = vector.shape_cast %42 : vector<16x1xf32> to vector<1x16x1xf32>
      %cst_21 = arith.constant dense<0.000000e+00> : vector<1xf32>
      %44 = vector.multi_reduction <add>, %43, %cst_21 [1, 2] : vector<1x16x1xf32> to vector<1xf32>
      %45 = vector.shape_cast %44 : vector<1xf32> to vector<1x1x1xf32>
      %46 = vector.extract %45[0, 0, 0] : f32 from vector<1x1x1xf32>
      %47 = vector.broadcast %46 : f32 to vector<1x1xf32>
      %48 = vector.shape_cast %47 : vector<1x1xf32> to vector<1x1x1xf32>
      %c0_22 = arith.constant 0 : index
      %c0_23 = arith.constant 0 : index
      %c0_24 = arith.constant 0 : index
      %49 = vector.load %arg5[%c0_22, %c0_23, %c0_24] : memref<1x1x1xf32, #tpu.memory_space<vmem>>, vector<1x1x1xf32>
      tpu.vector_store %arg5[%c0_22, %c0_23, %c0_24], %48 {strides = array<i32>} : memref<1x1x1xf32, #tpu.memory_space<vmem>>, vector<1x1x1xf32>,
    } else {
    }
    return
  }
  func.func @transform_0(%arg0: i32, %arg1: i32) -> (i32, i32) {
    %c1_i32 = arith.constant 1 : i32
    %0 = arith.muli %arg0, %c1_i32 : i32
    %1 = arith.addi %0, %arg1 : i32
    %c0_i32 = arith.constant 0 : i32
    %2 = arith.minsi %1, %c0_i32 : i32
    %c0_i32_0 = arith.constant 0 : i32
    %c0_i32_1 = arith.constant 0 : i32
    return %2, %c0_i32_0 : i32, i32
  }
  func.func @transform_1(%arg0: i32, %arg1: i32) -> (i32, i32) {
    %c1_i32 = arith.constant 1 : i32
    %0 = arith.muli %arg0, %c1_i32 : i32
    %1 = arith.addi %0, %arg1 : i32
    %c0_i32 = arith.constant 0 : i32
    %2 = arith.minsi %1, %c0_i32 : i32
    %c0_i32_0 = arith.constant 0 : i32
    %c0_i32_1 = arith.constant 0 : i32
    return %2, %c0_i32_0 : i32, i32
  }
  func.func @transform_2(%arg0: i32, %arg1: i32) -> (i32, i32) {
    %c1_i32 = arith.constant 1 : i32
    %0 = arith.muli %arg0, %c1_i32 : i32
    %1 = arith.addi %0, %arg1 : i32
    %c0_i32 = arith.constant 0 : i32
    %2 = arith.minsi %1, %c0_i32 : i32
    %c0_i32_0 = arith.constant 0 : i32
    %c0_i32_1 = arith.constant 0 : i32
    return %2, %c0_i32_0 : i32, i32
  }
  func.func @transform_3(%arg0: i32, %arg1: i32) -> (i32, i32, i32) {
    %c0_i32 = arith.constant 0 : i32
    %c0_i32_0 = arith.constant 0 : i32
    %c0_i32_1 = arith.constant 0 : i32
    return %arg0, %c0_i32, %c0_i32_0 : i32, i32, i32
  }
}

</mosaic_0001>

<llo_original>
// kernel: tpu_custom_call.1
$region0: #{tpu_custom_call.1}
  #allocation0 [shape = 'u32[]', space=smem, size = 0x4, offset = 0x4, fixed_abs, tag = 'smem constant byte address 0x4 - core index']
  #allocation1 [shape = 'u32[144,128]{1,0:T(1,128)}', space=vmem, size = 0x12000, scoped, tag = 'internal scratch']
  #allocation2 [shape = 'f32[16,1]{1,0:T(8,128)}', space=vmem, size = 0x2000, scoped, tag = 'scratch operand']
  %s0 = inlined_call_operand.vmem [shape: f32[16,32], index: 0, kind: input, shape index: {}]
  %s1 = inlined_call_operand.hbm [shape: f32[16,32], index: 1, kind: input, shape index: {}]
  %s2 = inlined_call_operand.vmem [shape: f32[16,1], index: 2, kind: input, shape index: {}]
  %s3 = inlined_call_operand.hbm [shape: f32[1,1,1], index: 3, kind: output, shape index: {}]
  %s4 = sld [smem:[#allocation0]]
  $region34: #{tpu_custom_call.1} parent=0
    _
  %s6 = ssub.s32 1, %s4
  %s7 = scalar_select 0, %s6, %s4
  $region1: #{tpu_custom_call.1} parent=0
    #allocation3 [shape = 'u8[8192]{0}', space=vmem, size = 0x2000, scoped, tag = 'input window, operand 1, single buffered']
    #allocation4 [shape = 's32[1]{0}', space=sflag, size = 0x4, scoped, tag = 'scoped memory for tpu_custom_call.1']
    #allocation5 [shape = 's32[1]{0}', space=sflag, size = 0x4, scoped, tag = 'scoped memory for tpu_custom_call.1']
    #allocation6 [shape = 'u8[512]{0}', space=vmem, size = 0x400, scoped, tag = 'output window, operand 0, single buffered']
    %8 = vsyncpa [#allocation4], 0
    %9 = vsyncpa [#allocation5], 0
    // Predicated region
    $region2: #{tpu_custom_call.1} parent=1 // pred_check
      _
    $region3: #{tpu_custom_call.1} parent=1 // pred_check_branch
      %11 = sbr.rel (0) target = $region5
    $region4: #{tpu_custom_call.1} parent=1 // pred_region
      %s12 = sadd.s32 0, 0
      %p13 = scmp.lt.s32.totalorder %s12, 0
      %s14 = scalar_select %p13, %s12, 0
      %s15 = smul.u32 2, %s14
      %p16 = scmp.lt.s32.totalorder %s15, 1
      %s17 = scalar_select %p16, %s15, 1
      %s18 = smul.addr %s17, 8
      %s19 = scalar_lea.vmem %s0, %s18
      %s20 = sadd.s32 0, 0
      %p21 = scmp.lt.s32.totalorder %s20, 0
      %s22 = scalar_select %p21, %s20, 0
      %s23 = smul.u32 2, %s22
    $region5: #{tpu_custom_call.1} parent=1 // pred_fallthru
      _
    // Predicated region
    $region6: #{tpu_custom_call.1} parent=1 // pred_check
      _
    $region7: #{tpu_custom_call.1} parent=1 // pred_check_branch
      %25 = sbr.rel (0) target = $region9
    $region8: #{tpu_custom_call.1} parent=1 // pred_region
      %s26 = sadd.s32 0, 0
      %p27 = scmp.lt.s32.totalorder %s26, 0
      %s28 = scalar_select %p27, %s26, 0
      %s29 = smul.u32 2, %s28
      %s31 = ssub.s32 256, 256
      %32 = vsyncadd [#allocation4], %s31
      %s33 = smul.addr %s29, 128
      %s34 = scalar_lea.hbm %s1, %s33
      %s35 = sshll.u32 [#allocation3], 4
      %s36 = int_to_ptr.vmem [resolvable:$true] %s35
      %41 = dma.hbm_to_vmem [thread:$0]  %s34, 256, %s36, [#allocation4], 128, 128, 8
    $region9: #{tpu_custom_call.1} parent=1 // pred_fallthru
      _
    // Predicated region
    $region10: #{tpu_custom_call.1} parent=1 // pred_check
      _
    $region11: #{tpu_custom_call.1} parent=1 // pred_check_branch
      %43 = sbr.rel (0) target = $region13
    $region12: #{tpu_custom_call.1} parent=1 // pred_region
      %s44 = sadd.s32 0, 0
      %p45 = scmp.lt.s32.totalorder %s44, 0
      %s46 = scalar_select %p45, %s44, 0
      %s47 = smul.u32 2, %s46
      %p48 = scmp.lt.s32.totalorder %s47, 1
      %s49 = scalar_select %p48, %s47, 1
      %s50 = smul.addr %s49, 8
      %s51 = scalar_lea.vmem %s2, %s50
      %s52 = sadd.s32 0, 0
      %p53 = scmp.lt.s32.totalorder %s52, 0
      %s54 = scalar_select %p53, %s52, 0
      %s55 = smul.u32 2, %s54
    $region13: #{tpu_custom_call.1} parent=1 // pred_fallthru
      _
    // Predicated region
    $region14: #{tpu_custom_call.1} parent=1 // pred_check
      _
    $region15: #{tpu_custom_call.1} parent=1 // pred_check_branch
      %57 = sbr.rel (0) target = $region17
    $region16: #{tpu_custom_call.1} parent=1 // pred_region
      %58 = dma.done [#allocation4], 256
    $region17: #{tpu_custom_call.1} parent=1 // pred_fallthru
      _
    %s59 = sadd.s32 0, 0
    %p60 = scmp.lt.s32.totalorder %s59, 0
    %s61 = scalar_select %p60, %s59, 0
    %s62 = smul.u32 2, %s61
    %p63 = scmp.lt.s32.totalorder %s62, 1
    %s64 = scalar_select %p63, %s62, 1
    %s65 = smul.addr %s64, 8
    %s66 = scalar_lea.vmem %s0, %s65
    %s67 = sadd.s32 0, 0
    %p68 = scmp.lt.s32.totalorder %s67, 0
    %s69 = scalar_select %p68, %s67, 0
    %s70 = smul.u32 2, %s69
    %p71 = scmp.lt.s32.totalorder %s70, 1
    %s72 = scalar_select %p71, %s70, 1
    %s73 = smul.addr %s72, 8
    %s74 = scalar_lea.vmem %s2, %s73
    %s75 = sadd.s32 0, 0
    %p76 = scmp.lt.s32.totalorder %s75, 0
    %s77 = scalar_select %p76, %s75, 0
    %s78 = smul.u32 2, %s77
    %p79 = scmp.lt.s32.totalorder %s78, 1
    %s80 = scalar_select %p79, %s78, 1
    %s81 = smul.addr %s80, 8
    %s82 = scalar_lea.vmem %s0, %s81
    %s83 = sadd.s32 0, 0
    %p84 = scmp.lt.s32.totalorder %s83, 0
    %s85 = scalar_select %p84, %s83, 0
    %s86 = smul.u32 2, %s85
    %s87 = sadd.s32 0, 0
    %p88 = scmp.lt.s32.totalorder %s87, 0
    %s89 = scalar_select %p88, %s87, 0
    %s90 = smul.u32 2, %s89
    %s91 = sadd.s32 0, 0
    %p92 = scmp.lt.s32.totalorder %s91, 0
    %s93 = scalar_select %p92, %s91, 0
    %s94 = smul.u32 2, %s93
    %p95 = scmp.lt.s32.totalorder %s94, 1
    %s96 = scalar_select %p95, %s94, 1
    %s97 = smul.addr %s96, 8
    %s98 = scalar_lea.vmem %s2, %s97
    %s99 = sadd.s32 0, 0
    %p100 = scmp.lt.s32.totalorder %s99, 0
    %s101 = scalar_select %p100, %s99, 0
    %s102 = smul.u32 2, %s101
    %p103 = scmp.eq.s32.totalorder 0, 0
    // Predicated region
    $region18: #{tpu_custom_call.1} parent=1 // pred_check
      %p104 = pneg %p103
    $region19: #{tpu_custom_call.1} parent=1 // pred_check_branch
      %106 = sbr.rel (%p104) target = $region21
    $region20: #{tpu_custom_call.1} parent=1 // pred_region
      %vm107 = vcmask 7168
      %108 = vst.msk [vmem:[#allocation2] sm:$0xff] %vm107, 0.0
      %109 = vst.msk [vmem:[#allocation2 + $0x8] sm:$0xff] %vm107, 0.0
    $region21: #{tpu_custom_call.1} parent=1 // pred_fallthru
      _
    %v110 = vld [vmem:[%s82] sm:$0xff]
    %v111 = vld [vmem:[%s82 + $0x8] sm:$0xff]
    %v112 = vld [vmem:[#allocation3] sm:$0xff]
    %v113 = vld [vmem:[#allocation3 + $0x8] sm:$0xff]
    %v114 = vmul.f32 %v110, %v112
    %v115 = vmul.f32 %v111, %v113
    %vm116 = vcmask 261120
    %v117 = vsel %vm116, %v114, 0.0
    %118 = vadd.xlane.f32.xlu0 %v117
    %v119 = vpop.xlane.xlu0 %118
    %v120 = vsel %vm116, %v115, 0.0
    %121 = vadd.xlane.f32.xlu0 %v120
    %v122 = vpop.xlane.xlu0 %121
    %v123 = vmul.f32 %v110, %v110
    %v124 = vmul.f32 %v111, %v111
    %v125 = vsel %vm116, %v123, 0.0
    %126 = vadd.xlane.f32.xlu0 %v125
    %v127 = vpop.xlane.xlu0 %126
    %v128 = vsel %vm116, %v124, 0.0
    %129 = vadd.xlane.f32.xlu0 %v128
    %v130 = vpop.xlane.xlu0 %129
    %v131 = vmul.f32 %v112, %v112
    %v132 = vmul.f32 %v113, %v113
    %v133 = vsel %vm116, %v131, 0.0
    %134 = vadd.xlane.f32.xlu0 %v133
    %v135 = vpop.xlane.xlu0 %134
    %v136 = vsel %vm116, %v132, 0.0
    %137 = vadd.xlane.f32.xlu0 %v136
    %v138 = vpop.xlane.xlu0 %137
    %v139 = vmax.f32 %v127, 1e-16
    %v140 = vmax.f32 %v130, 1e-16
    %v141 = vmax.f32 %v135, 1e-16
    %v142 = vmax.f32 %v138, 1e-16
    %v143 = vmul.f32 %v139, %v141
    %v144 = vmul.f32 %v140, %v142
    %v145 = vrsqrt.pop %v143
    %v146 = vrsqrt.pop %v144
    %v147 = vmul.f32 %v119, %v145
    %v148 = vmul.f32 %v122, %v146
    %v149 = vsub.f32 0.0, %v147
    %v150 = vsub.f32 0.0, %v148
    %v151 = vld [vmem:[%s98] sm:$0xff]
    %v152 = vld [vmem:[%s98 + $0x8] sm:$0xff]
    %v153 = vmul.f32 %v149, %v151
    %v154 = vmul.f32 %v150, %v152
    %s155 = sadd.s32 0, 0
    %s156 = smul.u32 %s155, 16
    %v157 = vlaneseq
    %v158 = vshrl.u32 %v157, 7
    %v159 = vadd.s32 %v158, 8
    %v160 = vstv %s156
    %v161 = vadd.s32 %v160, %v158
    %v162 = vadd.s32 %v160, %v159
    %vm163 = vcmp.lt.s32.totalorder %v161, 16
    %vm164 = vcmp.lt.s32.totalorder %v162, 16
    %v165 = vld [vmem:[#allocation2] sm:$0xff]
    %v166 = vld [vmem:[#allocation2 + $0x8] sm:$0xff]
    %v167 = vsel %vm163, %v153, 0.0
    %v168 = vsel %vm164, %v154, 0.0
    %v169 = vadd.f32 %v165, %v167
    %v170 = vadd.f32 %v166, %v168
    %vm171 = vcmask 7168
    %172 = vst.msk [vmem:[#allocation2] sm:$0xff] %vm171, %v169
    %173 = vst.msk [vmem:[#allocation2 + $0x8] sm:$0xff] %vm171, %v170
    // Predicated region
    $region22: #{tpu_custom_call.1} parent=1 // pred_check
      %p174 = pneg %p103
    $region23: #{tpu_custom_call.1} parent=1 // pred_check_branch
      %176 = sbr.rel (%p174) target = $region25
    $region24: #{tpu_custom_call.1} parent=1 // pred_region
      %v177 = vld [vmem:[#allocation2] sm:$0xff]
      %v178 = vld [vmem:[#allocation2 + $0x8] sm:$0xff]
      %v179 = vsel %vm171, %v177, 0.0
      %v180 = vsel %vm171, %v178, 0.0
      %v181 = vadd.f32 %v179, %v180
      %182 = vadd.xlane.f32.xlu0 %v181
      %v183 = vpop.xlane.xlu0 %182
      %v184 = vrot.slane %v183, 4
      %v185 = vadd.f32 %v183, %v184
      %v186 = vrot.slane %v185, 2
      %v187 = vadd.f32 %v185, %v186
      %v188 = vrot.slane %v187, 1
      %v189 = vadd.f32 %v187, %v188
      %s190 = vtos %v189
      %v191 = vstv %s190
      %vm192 = vcmask 0
      %193 = vst.msk [vmem:[#allocation6] sm:$0x1] %vm192, %v191
    $region25: #{tpu_custom_call.1} parent=1 // pred_fallthru
      _
    // Predicated region
    $region26: #{tpu_custom_call.1} parent=1 // pred_check
      _
    $region27: #{tpu_custom_call.1} parent=1 // pred_check_branch
      %195 = sbr.rel (0) target = $region29
    $region28: #{tpu_custom_call.1} parent=1 // pred_region
      %s197 = ssub.s32 16, 16
      %198 = vsyncadd [#allocation5], %s197
      %s200 = sshll.u32 [#allocation6], 4
      %s201 = int_to_ptr.vmem [resolvable:$true] %s200
      %203 = dma.vmem_to_hbm [thread:$0]  %s201, 16, %s3, [#allocation5]
    $region29: #{tpu_custom_call.1} parent=1 // pred_fallthru
      _
    // Predicated region
    $region30: #{tpu_custom_call.1} parent=1 // pred_check
      _
    $region31: #{tpu_custom_call.1} parent=1 // pred_check_branch
      %205 = sbr.rel (0) target = $region33
    $region32: #{tpu_custom_call.1} parent=1 // pred_region
      %206 = dma.done [#allocation5], 16
    $region33: #{tpu_custom_call.1} parent=1 // pred_fallthru
      _
    %207 = vsyncpa [#allocation4], 1
    %208 = vsyncpa [#allocation5], 1

</llo_original>
